<compile_context>
chip_gen: v5e
topology: v5e:2x2
jax: 0.10.0
libtpu: 0.0.40
codegen_flags: <defaults>
</compile_context>

<pallas_src>
import functools

import jax
import jax.numpy as jnp
from jax.experimental import pallas as pl
from jax.experimental.pallas import tpu as pltpu

# Cap below v7x's 64 MiB physical VMEM, leaving headroom for compiler scratch.
_VMEM_CAP_BYTES = 48 << 20


def _evonorm_kernel(x_ref, p_ref, o_ref, *, eps, inv_hw):
    # x_ref: (row_tile, hw)   rows = (n, c) pairs, lanes = full spatial extent
    # p_ref: (row_tile, 4)    per-row params [v, sqrt(running_var+eps), w, b]
    p = p_ref[...]
    v, rstd, w, b = p[:, 0:1], p[:, 1:2], p[:, 2:3], p[:, 3:4]

    x = x_ref[...].astype(jnp.float32)

    # Single-pass spatial variance (unbiased=False). The denominator uses the
    # true hw, so (rare) padded rows cannot bias the statistics of real rows.
    mean = jnp.sum(x, axis=-1, keepdims=True) * inv_hw
    mean_sq = jnp.sum(x * x, axis=-1, keepdims=True) * inv_hw
    inst_var = jnp.maximum(mean_sq - mean * mean, 0.0)

    d = x * v + jnp.sqrt(inst_var + eps)
    d = jnp.maximum(d, rstd)

    # EUP approximate reciprocal + one Newton step: ~f32-accurate 1/d while the
    # expensive part of the divide sits on the (otherwise idle) EUP slot.
    # (Dropping the Newton step would exceed the 1e-4 tolerance.)
    r = pl.reciprocal(d, approx=True)
    r = r * (2.0 - d * r)

    o_ref[...] = ((x * r) * w + b).astype(o_ref.dtype)


def _choose_row_tile(rows_p, hw, itemsize, *, target_tile_bytes=4 << 20,
                     min_grid=2):
    """Rows per block: a multiple of 8 that DIVIDES rows_p (no row padding),
    sized to ~target_tile_bytes of x, bounded by the VMEM budget, and capped so
    the 'parallel' grid axis has >= min_grid steps when enough rows exist
    (v7x has 2 TensorCores)."""
    hw_vmem = -(-hw // 128) * 128                      # lane-padded VMEM width
    # per-row VMEM: 2x in + 2x out (x dtype) + ~5 f32 whole-tile temps + params
    per_row_vmem = hw_vmem * (4 * itemsize + 5 * 4) + 2 * 128 * 4
    vmem_rows = max(8, ((_VMEM_CAP_BYTES - (4 << 20)) // per_row_vmem) // 8 * 8)

    ideal = max(8, (target_tile_bytes // max(1, hw_vmem * itemsize)) // 8 * 8)
    ideal = min(ideal, vmem_rows, rows_p)
    if rows_p >= 8 * min_grid:
        ideal = min(ideal, max(8, rows_p // min_grid))

    # largest multiple-of-8 divisor of rows_p that is <= ideal (8 always works,
    # since rows_p is a multiple of 8).
    best, t = 8, 8
    while t <= ideal:
        if rows_p % t == 0:
            best = t
        t += 8
    return best


def evonorm_batch2d(x, weight, bias, v, running_var, *, eps=1e-5,
                    apply_act=True):
    """EvoNormBatch2d eval-mode forward. x: (N, C, H, W)."""
    N, C, H, W = x.shape
    if not apply_act:
        # Plain per-channel affine; no reduction to kernelize (documented glue).
        return x * weight + bias

    rows, hw = N * C, H * W
    x2 = x.reshape(rows, hw)                  # free (contiguous) reshape
    itemsize = x2.dtype.itemsize

    # No spatial padding: the block's last dim equals the full array dim, so
    # the (8,128) constraint is satisfied without an extra HBM pad/slice pass.
    rows_p = -(-rows // 8) * 8
    row_tile = _choose_row_tile(rows_p, hw, itemsize)
    if rows_p != rows:
        # Rare (N*C not a multiple of 8): pad rows only. Padded rows read
        # zero params (rstd=w=b=0 => d=sqrt(eps)>0, finite, out=0) and are
        # sliced off below.
        x2 = jnp.pad(x2, ((0, rows_p - rows), (0, 0)))

    def per_row(p):  # (1, C, 1, 1) -> (rows,)
        return jnp.broadcast_to(p.reshape(1, C), (N, C)).reshape(rows)

    # Pack per-row params; sqrt(running_var + eps) precomputed once per channel.
    params = jnp.stack(
        [per_row(v).astype(jnp.float32),
         jnp.sqrt(per_row(running_var).astype(jnp.float32) + eps),
         per_row(weight).astype(jnp.float32),
         per_row(bias).astype(jnp.float32)], axis=-1)          # (rows, 4) f32
    if rows_p != rows:
        params = jnp.pad(params, ((0, rows_p - rows), (0, 0)))

    grid = (rows_p // row_tile,)
    hw_vmem = -(-hw // 128) * 128
    vmem_needed = (4 * row_tile * hw_vmem * itemsize          # 2x in + 2x out
                   + 5 * row_tile * hw_vmem * 4               # f32 temporaries
                   + 2 * row_tile * 128 * 4                   # lane-padded params
                   + (4 << 20))                               # headroom
    vmem_limit = int(min(_VMEM_CAP_BYTES, max(32 << 20, vmem_needed)))

    cost = pl.CostEstimate(
        flops=12 * rows * hw,
        transcendentals=rows * hw + rows,                     # reciprocal + sqrt
        bytes_accessed=2 * rows * hw * itemsize + params.size * 4)

    kernel = functools.partial(_evonorm_kernel, eps=float(eps),
                               inv_hw=1.0 / float(hw))

    out2 = pl.pallas_call(
        kernel,
        out_shape=jax.ShapeDtypeStruct((rows_p, hw), x.dtype),
        grid_spec=pltpu.PrefetchScalarGridSpec(
            num_scalar_prefetch=0,
            grid=grid,
            in_specs=[
                # streamed x tile (full spatial extent in the lane axis)
                pl.BlockSpec((row_tile, hw), lambda i: (i, 0)),
                # per-step params slab: tiny, pipelines with the x tile
                pl.BlockSpec((row_tile, 4), lambda i: (i, 0)),
            ],
            out_specs=pl.BlockSpec((row_tile, hw), lambda i: (i, 0)),
        ),
        compiler_params=pltpu.CompilerParams(
            dimension_semantics=("parallel",),
            vmem_limit_bytes=vmem_limit),
        cost_estimate=cost,
    )(x2, params)

    if rows_p != rows:
        out2 = out2[:rows]
    return out2.reshape(N, C, H, W)


def evonorm_batch2d_ref(x, weight, bias, v, running_var, *, eps=1e-5):
    """Pure-JAX reference mirroring the PyTorch eval-mode forward."""
    var = running_var                                   # (1, C, 1, 1)
    inst_var = jnp.var(x, axis=(2, 3), keepdims=True)   # unbiased=False
    d = x * v + jnp.sqrt(inst_var + eps)
    d = jnp.maximum(d, jnp.sqrt(var + eps))
    x = x / d
    return x * weight + bias


if __name__ == "__main__":
    num_features = 4
    N, C, H, W = 2, num_features, 16, 16

    key = jax.random.PRNGKey(0)
    kx, krv = jax.random.split(key)
    x = jax.random.normal(kx, (N, C, H, W), dtype=jnp.float32)

    # Deterministic parameter init (matches module __init__ / reset_parameters):
    param_shape = (1, num_features, 1, 1)
    weight = jnp.ones(param_shape, dtype=jnp.float32)
    bias = jnp.zeros(param_shape, dtype=jnp.float32)
    v = jnp.ones(param_shape, dtype=jnp.float32)
    # running_var buffer initialized to ones; perturb slightly (deterministic)
    # so the max() branch is actually exercised.
    running_var = jnp.ones(param_shape, dtype=jnp.float32) \
        + 0.1 * jax.random.uniform(krv, param_shape, dtype=jnp.float32)

    out = evonorm_batch2d(x, weight, bias, v, running_var, eps=1e-5)
    out = jax.block_until_ready(out)

    ref = evonorm_batch2d_ref(x, weight, bias, v, running_var, eps=1e-5)
    assert out.shape == (N, C, H, W)
    assert jnp.allclose(out, ref, atol=1e-4, rtol=1e-4), \
        float(jnp.max(jnp.abs(out - ref)))

    print("KERNEL_OK")
</pallas_src>

<mosaic_0001>
module attributes {stable_mosaic.version = 11 : i64} {
  func.func @_evonorm_kernel(%arg0: i32, %arg1: memref<8x256xf32, #tpu.memory_space<vmem>>, %arg2: memref<8x4xf32, #tpu.memory_space<vmem>>, %arg3: memref<8x256xf32, #tpu.memory_space<vmem>>) attributes {dimension_semantics = [#tpu.dimension_semantics<parallel>], iteration_bounds = array<i64: 1>, scalar_prefetch = 0 : i64, scratch_operands = 0 : i64, tpu.core_type = #tpu.core_type<tc>, window_params = [{transform_indices = @transform_0, window_bounds = array<i64: 8, 256>}, {transform_indices = @transform_1, window_bounds = array<i64: 8, 4>}, {transform_indices = @transform_2, window_bounds = array<i64: 8, 256>}]} {
    %c0 = arith.constant 0 : index
    %c0_0 = arith.constant 0 : index
    %0 = vector.load %arg2[%c0, %c0_0] : memref<8x4xf32, #tpu.memory_space<vmem>>, vector<8x4xf32>
    %1 = vector.extract_strided_slice %0 {offsets = [0, 0], sizes = [8, 1], strides = [1, 1]} : vector<8x4xf32> to vector<8x1xf32>
    %2 = vector.extract_strided_slice %0 {offsets = [0, 1], sizes = [8, 1], strides = [1, 1]} : vector<8x4xf32> to vector<8x1xf32>
    %3 = vector.extract_strided_slice %0 {offsets = [0, 2], sizes = [8, 1], strides = [1, 1]} : vector<8x4xf32> to vector<8x1xf32>
    %4 = vector.extract_strided_slice %0 {offsets = [0, 3], sizes = [8, 1], strides = [1, 1]} : vector<8x4xf32> to vector<8x1xf32>
    %c0_1 = arith.constant 0 : index
    %c0_2 = arith.constant 0 : index
    %5 = vector.load %arg1[%c0_1, %c0_2] : memref<8x256xf32, #tpu.memory_space<vmem>>, vector<8x256xf32>
    %cst = arith.constant dense<0.000000e+00> : vector<8xf32>
    %6 = vector.multi_reduction <add>, %5, %cst [1] : vector<8x256xf32> to vector<8xf32>
    %7 = vector.shape_cast %6 : vector<8xf32> to vector<8x1xf32>
    %cst_3 = arith.constant 3.906250e-03 : f32
    %8 = vector.broadcast %cst_3 : f32 to vector<8x1xf32>
    %9 = arith.mulf %7, %8 : vector<8x1xf32>
    %10 = arith.mulf %5, %5 : vector<8x256xf32>
    %cst_4 = arith.constant dense<0.000000e+00> : vector<8xf32>
    %11 = vector.multi_reduction <add>, %10, %cst_4 [1] : vector<8x256xf32> to vector<8xf32>
    %12 = vector.shape_cast %11 : vector<8xf32> to vector<8x1xf32>
    %cst_5 = arith.constant 3.906250e-03 : f32
    %13 = vector.broadcast %cst_5 : f32 to vector<8x1xf32>
    %14 = arith.mulf %12, %13 : vector<8x1xf32>
    %15 = arith.mulf %9, %9 : vector<8x1xf32>
    %16 = arith.subf %14, %15 : vector<8x1xf32>
    %cst_6 = arith.constant 0.000000e+00 : f32
    %17 = vector.broadcast %cst_6 : f32 to vector<8x1xf32>
    %18 = arith.maximumf %16, %17 : vector<8x1xf32>
    %19 = vector.broadcast %1 : vector<8x1xf32> to vector<8x256xf32>
    %20 = arith.mulf %5, %19 : vector<8x256xf32>
    %cst_7 = arith.constant 9.99999974E-6 : f32
    %21 = vector.broadcast %cst_7 : f32 to vector<8x1xf32>
    %22 = arith.addf %18, %21 : vector<8x1xf32>
    %23 = math.sqrt %22 : vector<8x1xf32>
    %24 = vector.broadcast %23 : vector<8x1xf32> to vector<8x256xf32>
    %25 = arith.addf %20, %24 : vector<8x256xf32>
    %26 = vector.broadcast %2 : vector<8x1xf32> to vector<8x256xf32>
    %27 = arith.maximumf %25, %26 : vector<8x256xf32>
    %28 = tpu.reciprocal %27 {approx = true} : vector<8x256xf32> -> vector<8x256xf32>
    %29 = arith.mulf %27, %28 : vector<8x256xf32>
    %cst_8 = arith.constant 2.000000e+00 : f32
    %30 = vector.broadcast %cst_8 : f32 to vector<8x256xf32>
    %31 = arith.subf %30, %29 : vector<8x256xf32>
    %32 = arith.mulf %28, %31 : vector<8x256xf32>
    %33 = arith.mulf %5, %32 : vector<8x256xf32>
    %34 = vector.broadcast %3 : vector<8x1xf32> to vector<8x256xf32>
    %35 = arith.mulf %33, %34 : vector<8x256xf32>
    %36 = vector.broadcast %4 : vector<8x1xf32> to vector<8x256xf32>
    %37 = arith.addf %35, %36 : vector<8x256xf32>
    %c0_9 = arith.constant 0 : index
    %c0_10 = arith.constant 0 : index
    %38 = vector.load %arg3[%c0_9, %c0_10] : memref<8x256xf32, #tpu.memory_space<vmem>>, vector<8x256xf32>
    tpu.vector_store %arg3[%c0_9, %c0_10], %37 {strides = array<i32>} : memref<8x256xf32, #tpu.memory_space<vmem>>, vector<8x256xf32>,
    return
  }
  func.func @transform_0(%arg0: i32) -> (i32, i32) {
    %c0_i32 = arith.constant 0 : i32
    %c0_i32_0 = arith.constant 0 : i32
    return %arg0, %c0_i32 : i32, i32
  }
  func.func @transform_1(%arg0: i32) -> (i32, i32) {
    %c0_i32 = arith.constant 0 : i32
    %c0_i32_0 = arith.constant 0 : i32
    return %arg0, %c0_i32 : i32, i32
  }
  func.func @transform_2(%arg0: i32) -> (i32, i32) {
    %c0_i32 = arith.constant 0 : i32
    %c0_i32_0 = arith.constant 0 : i32
    return %arg0, %c0_i32 : i32, i32
  }
}

</mosaic_0001>

<llo_original>
// kernel: tpu_custom_call.1
$region0: #{tpu_custom_call.1}
  #allocation0 [shape = 'u32[]', space=smem, size = 0x4, offset = 0x4, fixed_abs, tag = 'smem constant byte address 0x4 - core index']
  #allocation1 [shape = 'u32[72,128]{1,0:T(1,128)}', space=vmem, size = 0x9000, scoped, tag = 'internal scratch']
  %s0 = inlined_call_operand.hbm [shape: f32[8,256], index: 0, kind: input, shape index: {}]
  %s1 = inlined_call_operand.vmem [shape: f32[8,4], index: 1, kind: input, shape index: {}]
  %s2 = inlined_call_operand.hbm [shape: f32[8,256], index: 2, kind: output, shape index: {}]
  %s3 = sld [smem:[#allocation0]]
  $region22: #{tpu_custom_call.1} parent=0
    _
  %s5 = ssub.s32 1, %s3
  %s6 = scalar_select 0, %s5, %s3
  $region1: #{tpu_custom_call.1} parent=0
    #allocation2 [shape = 'u8[8192]{0}', space=vmem, size = 0x2000, scoped, tag = 'input window, operand 0, single buffered']
    #allocation3 [shape = 's32[1]{0}', space=sflag, size = 0x4, scoped, tag = 'scoped memory for tpu_custom_call.1']
    #allocation4 [shape = 's32[1]{0}', space=sflag, size = 0x4, scoped, tag = 'scoped memory for tpu_custom_call.1']
    #allocation5 [shape = 'u8[8192]{0}', space=vmem, size = 0x2000, scoped, tag = 'output window, operand 0, single buffered']
    %7 = vsyncpa [#allocation3], 0
    %8 = vsyncpa [#allocation4], 0
    // Predicated region
    $region2: #{tpu_custom_call.1} parent=1 // pred_check
      _
    $region3: #{tpu_custom_call.1} parent=1 // pred_check_branch
      %10 = sbr.rel (0) target = $region5
    $region4: #{tpu_custom_call.1} parent=1 // pred_region
      %12 = vsyncadd [#allocation3], 0
      %s14 = sshll.u32 %s0, 4
      %s15 = int_to_ptr.hbm [resolvable:$true] %s14
      %s16 = sshll.u32 [#allocation2], 4
      %s17 = int_to_ptr.vmem [resolvable:$true] %s16
      %19 = dma.hbm_to_vmem [thread:$0]  %s15, 256, %s17, [#allocation3]
    $region5: #{tpu_custom_call.1} parent=1 // pred_fallthru
      _
    // Predicated region
    $region6: #{tpu_custom_call.1} parent=1 // pred_check
      _
    $region7: #{tpu_custom_call.1} parent=1 // pred_check_branch
      %21 = sbr.rel (0) target = $region9
    $region8: #{tpu_custom_call.1} parent=1 // pred_region
      _
    $region9: #{tpu_custom_call.1} parent=1 // pred_fallthru
      _
    // Predicated region
    $region10: #{tpu_custom_call.1} parent=1 // pred_check
      _
    $region11: #{tpu_custom_call.1} parent=1 // pred_check_branch
      %23 = sbr.rel (0) target = $region13
    $region12: #{tpu_custom_call.1} parent=1 // pred_region
      %25 = dma.done [#allocation3], 256
    $region13: #{tpu_custom_call.1} parent=1 // pred_fallthru
      _
    %v26 = vld [vmem:[%s1] sm:$0xff]
    %v27 = vld [vmem:[#allocation2] sm:$0xff]
    %v28 = vld [vmem:[#allocation2 + $0x8] sm:$0xff]
    %v29 = vadd.f32 %v27, %v28
    %30 = vadd.xlane.f32.xlu0 %v29
    %v31 = vpop.xlane.xlu0 %30
    %v32 = vmul.f32 %v31, 0.00390625
    %v33 = vmul.f32 %v27, %v27
    %v34 = vmul.f32 %v28, %v28
    %v35 = vadd.f32 %v33, %v34
    %36 = vadd.xlane.f32.xlu0 %v35
    %v37 = vpop.xlane.xlu0 %36
    %v38 = vmul.f32 %v37, 0.00390625
    %v39 = vmul.f32 %v32, %v32
    %v40 = vsub.f32 %v38, %v39
    %v41 = vmax.f32 %v40, 0.0
    %43 = vset.pattern.permute.xlu0 0
    %44 = vperm.xlu0 %43, %v26
    %v45 = vpop.permute.xlu0 %44
    %v47 = vmul.f32 %v27, %v45
    %v48 = vmul.f32 %v28, %v45
    %v49 = vadd.f32 %v41, 1e-05
    %v50 = vrsqrt.pop %v49
    %v51 = vmul.f32 %v50, %v49
    %v52 = vmul.f32 %v51, %v50
    %v53 = vmul.f32 0.5, %v52
    %v54 = vsub.f32 1.5, %v53
    %v55 = vmul.f32 %v50, %v54
    %v56 = vmul.f32 %v49, %v55
    %vm57 = vcmp.eq.f32.partialorder %v49, inf
    %v58 = vsel %vm57, %v49, %v56
    %vm59 = vcmp.eq.f32.partialorder %v49, 0.0
    %v60 = vand.u32 %v49, 2147483648
    %v61 = vsel %vm59, %v60, %v58
    %v62 = vadd.f32 %v47, %v61
    %v63 = vadd.f32 %v48, %v61
    %64 = vset.pattern.permute.xlu0 1
    %65 = vperm.xlu0 %64, %v26
    %v66 = vpop.permute.xlu0 %65
    %v68 = vmax.f32 %v62, %v66
    %v69 = vmax.f32 %v63, %v66
    %v70 = vrcp.pop %v68
    %v71 = vrcp.pop %v69
    %v72 = vmul.f32 %v68, %v70
    %v73 = vmul.f32 %v69, %v71
    %v74 = vsub.f32 2.0, %v72
    %v75 = vsub.f32 2.0, %v73
    %v76 = vmul.f32 %v70, %v74
    %v77 = vmul.f32 %v71, %v75
    %v78 = vmul.f32 %v27, %v76
    %v79 = vmul.f32 %v28, %v77
    %80 = vset.pattern.permute.xlu0 2
    %81 = vperm.xlu0 %80, %v26
    %v82 = vpop.permute.xlu0 %81
    %v84 = vmul.f32 %v78, %v82
    %v85 = vmul.f32 %v79, %v82
    %86 = vset.pattern.permute.xlu0 3
    %87 = vperm.xlu0 %86, %v26
    %v88 = vpop.permute.xlu0 %87
    %v90 = vadd.f32 %v84, %v88
    %v91 = vadd.f32 %v85, %v88
    %92 = vst [vmem:[#allocation5] sm:$0xff] %v90
    %93 = vst [vmem:[#allocation5 + $0x8] sm:$0xff] %v91
    // Predicated region
    $region14: #{tpu_custom_call.1} parent=1 // pred_check
      _
    $region15: #{tpu_custom_call.1} parent=1 // pred_check_branch
      %95 = sbr.rel (0) target = $region17
    $region16: #{tpu_custom_call.1} parent=1 // pred_region
      %97 = vsyncadd [#allocation4], 0
      %s99 = sshll.u32 [#allocation5], 4
      %s100 = int_to_ptr.vmem [resolvable:$true] %s99
      %s101 = sshll.u32 %s2, 4
      %s102 = int_to_ptr.hbm [resolvable:$true] %s101
      %104 = dma.vmem_to_hbm [thread:$0]  %s100, 256, %s102, [#allocation4]
    $region17: #{tpu_custom_call.1} parent=1 // pred_fallthru
      _
    // Predicated region
    $region18: #{tpu_custom_call.1} parent=1 // pred_check
      _
    $region19: #{tpu_custom_call.1} parent=1 // pred_check_branch
      %106 = sbr.rel (0) target = $region21
    $region20: #{tpu_custom_call.1} parent=1 // pred_region
      %108 = dma.done [#allocation4], 256
    $region21: #{tpu_custom_call.1} parent=1 // pred_fallthru
      _
    %109 = vsyncpa [#allocation3], 1
    %110 = vsyncpa [#allocation4], 1

</llo_original>
